<compile_context>
chip_gen: v7x
topology: tpu7x:2x2x1
jax: 0.10.0
libtpu: 0.0.40
codegen_flags: <defaults>
</compile_context>

<pallas_src>
import functools

import jax
import jax.numpy as jnp
from jax.experimental import pallas as pl
from jax.experimental.pallas import tpu as pltpu

_LANES = 512          # lane-dense last dim (multiple of 128)
_MAX_TM = 2048        # rows per tile -> 2048*512*4B = 4 MiB per f32 input block


def _qfocal_kernel(pred_ref, true_ref, out_ref, *, gamma, alpha,
                   rows, tm, tpc, need_row_mask):
    c = pl.program_id(0)
    i = pl.program_id(1)

    @pl.when(i == 0)
    def _init():
        out_ref[...] = jnp.zeros_like(out_ref)

    x = pred_ref[...].astype(jnp.float32)
    t = true_ref[...].astype(jnp.float32)

    # 3 EUP pushes per element (tanh, log, sqrt); no exp, no divide.
    th = jnp.tanh(0.5 * x)                       # EUP tanh
    p = 0.5 * (th + 1.0)                         # sigmoid(x)
    sig_abs = 0.5 * (jnp.abs(th) + 1.0)          # sigmoid(|x|) in [0.5, 1]
    bce = jnp.maximum(x, 0.0) - x * t - jnp.log(sig_abs)   # stable BCEWithLogits

    af = t * (2.0 * alpha - 1.0) + (1.0 - alpha)            # single FMA
    d = jnp.abs(t - p)
    if gamma == 1.5:                             # default fast path: d**1.5
        mf = d * jnp.sqrt(d)                     # EUP sqrt
    elif gamma == 2.0:
        mf = d * d
    elif gamma == 1.0:
        mf = d
    else:                                        # generic gamma > 0
        mf = jnp.where(d > 0, jnp.exp(gamma * jnp.log(jnp.maximum(d, 1e-30))), 0.0)

    prod = bce * af * mf

    if need_row_mask:
        # Zero rows of the tile grid that lie past the real array (over-read).
        row_start = (c * tpc + i) * tm
        row_ids = row_start + jax.lax.broadcasted_iota(jnp.int32, (tm, 1), 0)
        prod = jnp.where(row_ids < rows, prod, 0.0)

    # Free sublane regroup (tm,L)->(tm//8,8,L); axis-0 sum is pure VPU adds.
    out_ref[...] += prod.reshape(tm // 8, 8, _LANES).sum(axis=0)


def qfocal_loss(pred, true, gamma=1.5, alpha=0.25, reduction="mean"):
    """pred, true: same shape (any). Returns scalar loss (mean/sum)."""
    assert pred.shape == true.shape
    assert gamma > 0, "gamma must be > 0"
    if (not jnp.issubdtype(pred.dtype, jnp.floating)) or pred.dtype == jnp.float64:
        pred = pred.astype(jnp.float32)
    if (not jnp.issubdtype(true.dtype, jnp.floating)) or true.dtype == jnp.float64:
        true = true.astype(pred.dtype)

    n = pred.size
    rows = pl.cdiv(n, _LANES)

    if n == rows * _LANES and rows >= 8:
        # Common case: free bitcast reshape, no padded HBM copy.
        pred2d = pred.reshape(rows, _LANES)
        true2d = true.reshape(rows, _LANES)
    else:
        # Fallback (lane-ragged or tiny input): zero-contribution pad
        # (pred=0, true=0.5 -> sigmoid(0)=0.5 -> |t-p|=0 -> mf=0 since gamma>0).
        rows = max(rows, 8)
        pad = rows * _LANES - n
        pred2d = jnp.pad(pred.reshape(-1), (0, pad),
                         constant_values=0.0).reshape(rows, _LANES)
        true2d = jnp.pad(true.reshape(-1), (0, pad),
                         constant_values=0.5).reshape(rows, _LANES)

    # Tile sizing: balance tile count first, then rows/tile (multiple of 8,
    # never larger than the array's row count).
    tm_cap = min(_MAX_TM, (rows // 8) * 8)
    tiles0 = pl.cdiv(rows, tm_cap)
    nc = 2 if tiles0 >= 2 else 1            # parallel chunks (v7x megacore)
    tiles = pl.cdiv(tiles0, nc) * nc
    tm = min(((pl.cdiv(rows, tiles) + 7) // 8) * 8, tm_cap)
    tpc = tiles // nc                       # tiles per chunk
    need_row_mask = tiles * tm > rows       # grid over-reads past last row

    kernel = functools.partial(
        _qfocal_kernel, gamma=gamma, alpha=alpha,
        rows=rows, tm=tm, tpc=tpc, need_row_mask=need_row_mask)

    in_bytes = (pred2d.size * pred2d.dtype.itemsize
                + true2d.size * true2d.dtype.itemsize)
    out_bytes = nc * 8 * _LANES * 4
    cost = pl.CostEstimate(flops=14 * n, transcendentals=3 * n,
                           bytes_accessed=in_bytes + out_bytes)

    partials = pl.pallas_call(
        kernel,
        out_shape=jax.ShapeDtypeStruct((nc * 8, _LANES), jnp.float32),
        grid_spec=pltpu.PrefetchScalarGridSpec(
            num_scalar_prefetch=0,
            grid=(nc, tpc),
            in_specs=[
                pl.BlockSpec((tm, _LANES), lambda c, i: (c * tpc + i, 0)),
                pl.BlockSpec((tm, _LANES), lambda c, i: (c * tpc + i, 0)),
            ],
            out_specs=pl.BlockSpec((8, _LANES), lambda c, i: (c, 0)),
        ),
        compiler_params=pltpu.CompilerParams(
            # TODO(synk): if a v7x profile shows one TensorCore idle, try
            # pltpu.CORE_PARALLEL on the leading axis.
            dimension_semantics=("parallel", "arbitrary"),
            vmem_limit_bytes=32 * 1024 * 1024),
        cost_estimate=cost,
    )(pred2d, true2d)

    total = jnp.sum(partials)   # single cross-lane reduce, once, in the wrapper

    if reduction == "mean":
        return total / jnp.float32(n)
    elif reduction == "sum":
        return total
    else:
        raise NotImplementedError  # TODO(synk): 'none' reduction (elementwise map output) not implemented


if __name__ == "__main__":
    key = jax.random.PRNGKey(0)
    k1, k2 = jax.random.split(key)
    # NCHW-like shapes: batch=2, channels=4, spatial=16x16
    shape = (2, 4, 16, 16)
    pred = jax.random.normal(k1, shape, dtype=jnp.float32)             # logits
    true = (jax.random.uniform(k2, shape) > 0.5).astype(jnp.float32)   # {0,1} targets

    out = qfocal_loss(pred, true, reduction="mean")
    jax.block_until_ready(out)

    # Pure-JAX reference check
    bce = jnp.maximum(pred, 0.0) - pred * true + jnp.log1p(jnp.exp(-jnp.abs(pred)))
    p = jax.nn.sigmoid(pred)
    af = true * 0.25 + (1.0 - true) * (1.0 - 0.25)
    mf = jnp.abs(true - p) ** 1.5
    ref = jnp.mean(bce * af * mf)
    assert jnp.allclose(out, ref, rtol=1e-4, atol=1e-6), (out, ref)

    print("KERNEL_OK")
</pallas_src>

<mosaic_0001>
module attributes {stable_mosaic.version = 11 : i64} {
  func.func @_qfocal_kernel(%arg0: i32, %arg1: i32, %arg2: memref<8x512xf32, #tpu.memory_space<vmem>>, %arg3: memref<8x512xf32, #tpu.memory_space<vmem>>, %arg4: memref<8x512xf32, #tpu.memory_space<vmem>>) attributes {dimension_semantics = [#tpu.dimension_semantics<parallel>, #tpu.dimension_semantics<arbitrary>], iteration_bounds = array<i64: 1, 1>, scalar_prefetch = 0 : i64, scratch_operands = 0 : i64, tpu.core_type = #tpu.core_type<tc>, window_params = [{transform_indices = @transform_0, window_bounds = array<i64: 8, 512>}, {transform_indices = @transform_1, window_bounds = array<i64: 8, 512>}, {transform_indices = @transform_2, window_bounds = array<i64: 8, 512>}]} {
    %c0_i32 = arith.constant 0 : i32
    %0 = arith.cmpi eq, %arg1, %c0_i32 : i32
    %1 = arith.extui %0 : i1 to i32
    %c0_i32_0 = arith.constant 0 : i32
    %2 = arith.cmpi ne, %1, %c0_i32_0 : i32
    scf.if %2 {
      %cst_16 = arith.constant 0.000000e+00 : f32
      %38 = vector.broadcast %cst_16 : f32 to vector<8x512xf32>
      %c0_17 = arith.constant 0 : index
      %c0_18 = arith.constant 0 : index
      %39 = vector.load %arg4[%c0_17, %c0_18] : memref<8x512xf32, #tpu.memory_space<vmem>>, vector<8x512xf32>
      tpu.vector_store %arg4[%c0_17, %c0_18], %38 {strides = array<i32>} : memref<8x512xf32, #tpu.memory_space<vmem>>, vector<8x512xf32>,
    } else {
    }
    %c0 = arith.constant 0 : index
    %c0_1 = arith.constant 0 : index
    %3 = vector.load %arg2[%c0, %c0_1] : memref<8x512xf32, #tpu.memory_space<vmem>>, vector<8x512xf32>
    %c0_2 = arith.constant 0 : index
    %c0_3 = arith.constant 0 : index
    %4 = vector.load %arg3[%c0_2, %c0_3] : memref<8x512xf32, #tpu.memory_space<vmem>>, vector<8x512xf32>
    %cst = arith.constant 5.000000e-01 : f32
    %5 = vector.broadcast %cst : f32 to vector<8x512xf32>
    %6 = arith.mulf %5, %3 : vector<8x512xf32>
    %7 = math.tanh %6 : vector<8x512xf32>
    %cst_4 = arith.constant 1.000000e+00 : f32
    %8 = vector.broadcast %cst_4 : f32 to vector<8x512xf32>
    %9 = arith.addf %7, %8 : vector<8x512xf32>
    %cst_5 = arith.constant 5.000000e-01 : f32
    %10 = vector.broadcast %cst_5 : f32 to vector<8x512xf32>
    %11 = arith.mulf %10, %9 : vector<8x512xf32>
    %12 = math.absf %7 : vector<8x512xf32>
    %cst_6 = arith.constant 1.000000e+00 : f32
    %13 = vector.broadcast %cst_6 : f32 to vector<8x512xf32>
    %14 = arith.addf %12, %13 : vector<8x512xf32>
    %cst_7 = arith.constant 5.000000e-01 : f32
    %15 = vector.broadcast %cst_7 : f32 to vector<8x512xf32>
    %16 = arith.mulf %15, %14 : vector<8x512xf32>
    %cst_8 = arith.constant 0.000000e+00 : f32
    %17 = vector.broadcast %cst_8 : f32 to vector<8x512xf32>
    %18 = arith.maximumf %3, %17 : vector<8x512xf32>
    %19 = arith.mulf %3, %4 : vector<8x512xf32>
    %20 = arith.subf %18, %19 : vector<8x512xf32>
    %21 = math.log %16 : vector<8x512xf32>
    %22 = arith.subf %20, %21 : vector<8x512xf32>
    %cst_9 = arith.constant -5.000000e-01 : f32
    %23 = vector.broadcast %cst_9 : f32 to vector<8x512xf32>
    %24 = arith.mulf %4, %23 : vector<8x512xf32>
    %cst_10 = arith.constant 7.500000e-01 : f32
    %25 = vector.broadcast %cst_10 : f32 to vector<8x512xf32>
    %26 = arith.addf %24, %25 : vector<8x512xf32>
    %27 = arith.subf %4, %11 : vector<8x512xf32>
    %28 = math.absf %27 : vector<8x512xf32>
    %29 = math.sqrt %28 : vector<8x512xf32>
    %30 = arith.mulf %28, %29 : vector<8x512xf32>
    %31 = arith.mulf %22, %26 : vector<8x512xf32>
    %32 = arith.mulf %31, %30 : vector<8x512xf32>
    %c0_11 = arith.constant 0 : index
    %c0_12 = arith.constant 0 : index
    %33 = vector.load %arg4[%c0_11, %c0_12] : memref<8x512xf32, #tpu.memory_space<vmem>>, vector<8x512xf32>
    %34 = vector.shape_cast %32 : vector<8x512xf32> to vector<1x8x512xf32>
    %cst_13 = arith.constant dense<0.000000e+00> : vector<8x512xf32>
    %35 = vector.multi_reduction <add>, %34, %cst_13 [0] : vector<1x8x512xf32> to vector<8x512xf32>
    %36 = arith.addf %33, %35 : vector<8x512xf32>
    %c0_14 = arith.constant 0 : index
    %c0_15 = arith.constant 0 : index
    %37 = vector.load %arg4[%c0_14, %c0_15] : memref<8x512xf32, #tpu.memory_space<vmem>>, vector<8x512xf32>
    tpu.vector_store %arg4[%c0_14, %c0_15], %36 {strides = array<i32>} : memref<8x512xf32, #tpu.memory_space<vmem>>, vector<8x512xf32>,
    return
  }
  func.func @transform_0(%arg0: i32, %arg1: i32) -> (i32, i32) {
    %c1_i32 = arith.constant 1 : i32
    %0 = arith.muli %arg0, %c1_i32 : i32
    %1 = arith.addi %0, %arg1 : i32
    %c0_i32 = arith.constant 0 : i32
    %c0_i32_0 = arith.constant 0 : i32
    return %1, %c0_i32 : i32, i32
  }
  func.func @transform_1(%arg0: i32, %arg1: i32) -> (i32, i32) {
    %c1_i32 = arith.constant 1 : i32
    %0 = arith.muli %arg0, %c1_i32 : i32
    %1 = arith.addi %0, %arg1 : i32
    %c0_i32 = arith.constant 0 : i32
    %c0_i32_0 = arith.constant 0 : i32
    return %1, %c0_i32 : i32, i32
  }
  func.func @transform_2(%arg0: i32, %arg1: i32) -> (i32, i32) {
    %c0_i32 = arith.constant 0 : i32
    %c0_i32_0 = arith.constant 0 : i32
    return %arg0, %c0_i32 : i32, i32
  }
}

</mosaic_0001>

<llo_original>
// kernel: tpu_custom_call.1
$region0: #{tpu_custom_call.1}
  #allocation0 [shape = 'u32[]', space=smem, size = 0x4, offset = 0x4, fixed_abs, tag = 'smem constant byte address 0x4 - core index']
  #allocation1 [shape = 'u32[144,128]{1,0:T(1,128)}', space=vmem, size = 0x12000, scoped, tag = 'internal scratch']
  %s0 = inlined_call_operand.hbm [shape: f32[8,512], index: 0, kind: input, shape index: {}]
  %s1 = inlined_call_operand.hbm [shape: f32[8,512], index: 1, kind: input, shape index: {}]
  %s2 = inlined_call_operand.hbm [shape: f32[8,512], index: 2, kind: output, shape index: {}]
  %s3 = sld [smem:[#allocation0]]
  $region30: #{tpu_custom_call.1} parent=0
    _
  %s5 = ssub.s32 1, %s3
  %s6 = scalar_select 0, %s5, %s3
  $region1: #{tpu_custom_call.1} parent=0
    #allocation2 [shape = 'u8[16384]{0}', space=vmem, size = 0x4000, scoped, tag = 'input window, operand 0, single buffered']
    #allocation3 [shape = 's32[1]{0}', space=sflag, size = 0x4, scoped, tag = 'scoped memory for tpu_custom_call.1']
    #allocation4 [shape = 's32[1]{0}', space=sflag, size = 0x4, scoped, tag = 'scoped memory for tpu_custom_call.1']
    #allocation5 [shape = 'u8[16384]{0}', space=vmem, size = 0x4000, scoped, tag = 'input window, operand 1, single buffered']
    #allocation6 [shape = 's32[1]{0}', space=sflag, size = 0x4, scoped, tag = 'scoped memory for tpu_custom_call.1']
    #allocation7 [shape = 'u8[16384]{0}', space=vmem, size = 0x4000, scoped, tag = 'output window, operand 0, single buffered']
    %7 = vsyncpa [#allocation3], 0
    %8 = vsyncpa [#allocation6], 0
    %9 = vsyncpa [#allocation4], 0
    // Predicated region
    $region2: #{tpu_custom_call.1} parent=1 // pred_check
      _
    $region3: #{tpu_custom_call.1} parent=1 // pred_check_branch
      %11 = sbr.rel (0) target = $region5
    $region4: #{tpu_custom_call.1} parent=1 // pred_region
      %s12 = sadd.s32 0, 0
      %s14 = ssub.s32 512, 512
      %15 = vsyncadd [#allocation3], %s14
      %s16 = smul.addr %s12, 4
      %s17 = smul.addr %s16, 128
      %s18 = scalar_lea.hbm %s0, %s17
      %s20 = sshll.u32 [#allocation2], 4
      %s21 = int_to_ptr.vmem [resolvable:$true] %s20
      %23 = dma.hbm_to_vmem [thread:$0]  %s18, 512, %s21, [#allocation3]
    $region5: #{tpu_custom_call.1} parent=1 // pred_fallthru
      _
    // Predicated region
    $region6: #{tpu_custom_call.1} parent=1 // pred_check
      _
    $region7: #{tpu_custom_call.1} parent=1 // pred_check_branch
      %25 = sbr.rel (0) target = $region9
    $region8: #{tpu_custom_call.1} parent=1 // pred_region
      %s26 = sadd.s32 0, 0
      %s28 = ssub.s32 512, 512
      %29 = vsyncadd [#allocation6], %s28
      %s30 = smul.addr %s26, 4
      %s31 = smul.addr %s30, 128
      %s32 = scalar_lea.hbm %s1, %s31
      %s34 = sshll.u32 [#allocation5], 4
      %s35 = int_to_ptr.vmem [resolvable:$true] %s34
      %37 = dma.hbm_to_vmem [thread:$0]  %s32, 512, %s35, [#allocation6]
    $region9: #{tpu_custom_call.1} parent=1 // pred_fallthru
      _
    // Predicated region
    $region10: #{tpu_custom_call.1} parent=1 // pred_check
      _
    $region11: #{tpu_custom_call.1} parent=1 // pred_check_branch
      %39 = sbr.rel (0) target = $region13
    $region12: #{tpu_custom_call.1} parent=1 // pred_region
      %40 = dma.done [#allocation3], 512
    $region13: #{tpu_custom_call.1} parent=1 // pred_fallthru
      _
    // Predicated region
    $region14: #{tpu_custom_call.1} parent=1 // pred_check
      _
    $region15: #{tpu_custom_call.1} parent=1 // pred_check_branch
      %42 = sbr.rel (0) target = $region17
    $region16: #{tpu_custom_call.1} parent=1 // pred_region
      %43 = dma.done [#allocation6], 512
    $region17: #{tpu_custom_call.1} parent=1 // pred_fallthru
      _
    %s44 = sadd.s32 0, 0
    %s45 = sadd.s32 0, 0
    %p46 = scmp.eq.s32.totalorder 0, 0
    // Predicated region
    $region18: #{tpu_custom_call.1} parent=1 // pred_check
      %p47 = pneg %p46
    $region19: #{tpu_custom_call.1} parent=1 // pred_check_branch
      %49 = sbr.rel (%p47) target = $region21
    $region20: #{tpu_custom_call.1} parent=1 // pred_region
      %50 = vst [vmem:[#allocation7] sm:$0xff] 0.0
      %51 = vst [vmem:[#allocation7 + $0x8] sm:$0xff] 0.0
      %52 = vst [vmem:[#allocation7 + $0x10] sm:$0xff] 0.0
      %53 = vst [vmem:[#allocation7 + $0x18] sm:$0xff] 0.0
    $region21: #{tpu_custom_call.1} parent=1 // pred_fallthru
      _
    %v54 = vld [vmem:[#allocation2] sm:$0xff]
    %v55 = vld [vmem:[#allocation2 + $0x8] sm:$0xff]
    %v56 = vld [vmem:[#allocation2 + $0x10] sm:$0xff]
    %v57 = vld [vmem:[#allocation2 + $0x18] sm:$0xff]
    %v58 = vld [vmem:[#allocation5] sm:$0xff]
    %v59 = vld [vmem:[#allocation5 + $0x8] sm:$0xff]
    %v60 = vld [vmem:[#allocation5 + $0x10] sm:$0xff]
    %v61 = vld [vmem:[#allocation5 + $0x18] sm:$0xff]
    %v62 = vmul.f32 %v54, 0.5
    %v63 = vmul.f32 %v55, 0.5
    %v64 = vmul.f32 %v56, 0.5
    %v65 = vmul.f32 %v57, 0.5
    %v66 = vtanh.pop %v62
    %v67 = vtanh.pop %v63
    %v68 = vtanh.pop %v64
    %v69 = vtanh.pop %v65
    %v70 = vadd.f32 %v66, 1.0
    %v71 = vadd.f32 %v67, 1.0
    %v72 = vadd.f32 %v68, 1.0
    %v73 = vadd.f32 %v69, 1.0
    %v74 = vmul.f32 %v70, 0.5
    %v75 = vmul.f32 %v71, 0.5
    %v76 = vmul.f32 %v72, 0.5
    %v77 = vmul.f32 %v73, 0.5
    %v78 = vand.u32 2147483647, %v66
    %v79 = vand.u32 2147483647, %v67
    %v80 = vand.u32 2147483647, %v68
    %v81 = vand.u32 2147483647, %v69
    %v82 = vadd.f32 %v78, 1.0
    %v83 = vadd.f32 %v79, 1.0
    %v84 = vadd.f32 %v80, 1.0
    %v85 = vadd.f32 %v81, 1.0
    %v86 = vmul.f32 %v82, 0.5
    %v87 = vmul.f32 %v83, 0.5
    %v88 = vmul.f32 %v84, 0.5
    %v89 = vmul.f32 %v85, 0.5
    %v90 = vmax.f32 %v54, 0.0
    %v91 = vmax.f32 %v55, 0.0
    %v92 = vmax.f32 %v56, 0.0
    %v93 = vmax.f32 %v57, 0.0
    %v94 = vmul.f32 %v54, %v58
    %v95 = vmul.f32 %v55, %v59
    %v96 = vmul.f32 %v56, %v60
    %v97 = vmul.f32 %v57, %v61
    %v98 = vsub.f32 %v90, %v94
    %v99 = vsub.f32 %v91, %v95
    %v100 = vsub.f32 %v92, %v96
    %v101 = vsub.f32 %v93, %v97
    %v102 = vlog2.pop %v86
    %v103 = vmul.f32 %v102, 0.6931472
    %v104 = vlog2.pop %v87
    %v105 = vmul.f32 %v104, 0.6931472
    %v106 = vlog2.pop %v88
    %v107 = vmul.f32 %v106, 0.6931472
    %v108 = vlog2.pop %v89
    %v109 = vmul.f32 %v108, 0.6931472
    %v110 = vsub.f32 %v98, %v103
    %v111 = vsub.f32 %v99, %v105
    %v112 = vsub.f32 %v100, %v107
    %v113 = vsub.f32 %v101, %v109
    %v114 = vmul.f32 %v58, -0.5
    %v115 = vmul.f32 %v59, -0.5
    %v116 = vmul.f32 %v60, -0.5
    %v117 = vmul.f32 %v61, -0.5
    %v118 = vadd.f32 %v114, 0.75
    %v119 = vadd.f32 %v115, 0.75
    %v120 = vadd.f32 %v116, 0.75
    %v121 = vadd.f32 %v117, 0.75
    %v122 = vsub.f32 %v58, %v74
    %v123 = vsub.f32 %v59, %v75
    %v124 = vsub.f32 %v60, %v76
    %v125 = vsub.f32 %v61, %v77
    %v126 = vand.u32 2147483647, %v122
    %v127 = vand.u32 2147483647, %v123
    %v128 = vand.u32 2147483647, %v124
    %v129 = vand.u32 2147483647, %v125
    %v130 = vrsqrt.pop %v126
    %v131 = vmul.f32 %v126, %v130
    %vm132 = vcmp.eq.f32.partialorder %v126, inf
    %v133 = vsel %vm132, %v126, %v131
    %vm134 = vcmp.eq.f32.partialorder %v126, 0.0
    %v135 = vand.u32 %v126, 2147483648
    %v136 = vsel %vm134, %v135, %v133
    %v137 = vrsqrt.pop %v127
    %v138 = vmul.f32 %v127, %v137
    %vm139 = vcmp.eq.f32.partialorder %v127, inf
    %v140 = vsel %vm139, %v127, %v138
    %vm141 = vcmp.eq.f32.partialorder %v127, 0.0
    %v142 = vand.u32 %v127, 2147483648
    %v143 = vsel %vm141, %v142, %v140
    %v144 = vrsqrt.pop %v128
    %v145 = vmul.f32 %v128, %v144
    %vm146 = vcmp.eq.f32.partialorder %v128, inf
    %v147 = vsel %vm146, %v128, %v145
    %vm148 = vcmp.eq.f32.partialorder %v128, 0.0
    %v149 = vand.u32 %v128, 2147483648
    %v150 = vsel %vm148, %v149, %v147
    %v151 = vrsqrt.pop %v129
    %v152 = vmul.f32 %v129, %v151
    %vm153 = vcmp.eq.f32.partialorder %v129, inf
    %v154 = vsel %vm153, %v129, %v152
    %vm155 = vcmp.eq.f32.partialorder %v129, 0.0
    %v156 = vand.u32 %v129, 2147483648
    %v157 = vsel %vm155, %v156, %v154
    %v158 = vmul.f32 %v126, %v136
    %v159 = vmul.f32 %v127, %v143
    %v160 = vmul.f32 %v128, %v150
    %v161 = vmul.f32 %v129, %v157
    %v162 = vmul.f32 %v110, %v118
    %v163 = vmul.f32 %v111, %v119
    %v164 = vmul.f32 %v112, %v120
    %v165 = vmul.f32 %v113, %v121
    %v166 = vmul.f32 %v162, %v158
    %v167 = vmul.f32 %v163, %v159
    %v168 = vmul.f32 %v164, %v160
    %v169 = vmul.f32 %v165, %v161
    %v170 = vld [vmem:[#allocation7] sm:$0xff]
    %v171 = vld [vmem:[#allocation7 + $0x8] sm:$0xff]
    %v172 = vld [vmem:[#allocation7 + $0x10] sm:$0xff]
    %v173 = vld [vmem:[#allocation7 + $0x18] sm:$0xff]
    %v174 = vadd.f32 %v166, 0.0
    %v175 = vadd.f32 %v167, 0.0
    %v176 = vadd.f32 %v168, 0.0
    %v177 = vadd.f32 %v169, 0.0
    %v178 = vadd.f32 %v170, %v174
    %v179 = vadd.f32 %v171, %v175
    %v180 = vadd.f32 %v172, %v176
    %v181 = vadd.f32 %v173, %v177
    %182 = vst [vmem:[#allocation7] sm:$0xff] %v178
    %183 = vst [vmem:[#allocation7 + $0x8] sm:$0xff] %v179
    %184 = vst [vmem:[#allocation7 + $0x10] sm:$0xff] %v180
    %185 = vst [vmem:[#allocation7 + $0x18] sm:$0xff] %v181
    // Predicated region
    $region22: #{tpu_custom_call.1} parent=1 // pred_check
      _
    $region23: #{tpu_custom_call.1} parent=1 // pred_check_branch
      %187 = sbr.rel (0) target = $region25
    $region24: #{tpu_custom_call.1} parent=1 // pred_region
      %s189 = ssub.s32 512, 512
      %190 = vsyncadd [#allocation4], %s189
      %s192 = sshll.u32 [#allocation7], 4
      %s193 = int_to_ptr.vmem [resolvable:$true] %s192
      %195 = dma.vmem_to_hbm [thread:$0]  %s193, 512, %s2, [#allocation4]
    $region25: #{tpu_custom_call.1} parent=1 // pred_fallthru
      _
    // Predicated region
    $region26: #{tpu_custom_call.1} parent=1 // pred_check
      _
    $region27: #{tpu_custom_call.1} parent=1 // pred_check_branch
      %197 = sbr.rel (0) target = $region29
    $region28: #{tpu_custom_call.1} parent=1 // pred_region
      %198 = dma.done [#allocation4], 512
    $region29: #{tpu_custom_call.1} parent=1 // pred_fallthru
      _
    %199 = vsyncpa [#allocation3], 1
    %200 = vsyncpa [#allocation6], 1
    %201 = vsyncpa [#allocation4], 1

</llo_original>
